<compile_context>
chip_gen: v5e
topology: v5e:2x2
jax: 0.10.0
libtpu: 0.0.40
codegen_flags: <defaults>
</compile_context>

<pallas_src>
import functools

import jax
import jax.numpy as jnp
from jax import lax
from jax.experimental import pallas as pl
from jax.experimental.pallas import tpu as pltpu

OUT_CHANNELS = 30
KERNEL_SIZE = 10
CPAD = 128          # lane-padded channel group width


def _round_up(n, m):
    return (n + m - 1) // m * m


def _cnn_stocks_kernel(x_ref, toep_ref, params_ref, out_ref):
    # x_ref:      (TB, W)       f32   batch tile
    # toep_ref:   (W, T*CPAD)   bf16  zero-banded Toeplitz conv weight,
    #                                 128-lane column group per window position
    # params_ref: (4, CPAD)     f32   rows: [conv bias | lin weight | valid mask | lin bias]
    # out_ref:    (1, 1, TB)    f32   lane-dense output row for this batch tile
    x = x_ref[...].astype(jnp.bfloat16)               # enable native bf16 MXU
    params = params_ref[...]
    cpad = params.shape[1]
    T = toep_ref.shape[1] // cpad

    # Fused Conv1d + global MaxPool1d, chunked over lane-aligned 128-wide
    # column groups (one MXU pass per window position, running max on the VPU).
    pooled = jnp.dot(x, toep_ref[:, 0:cpad], preferred_element_type=jnp.float32)
    for t in range(1, T):
        chunk = jnp.dot(x, toep_ref[:, t * cpad:(t + 1) * cpad],
                        preferred_element_type=jnp.float32)
        pooled = jnp.maximum(pooled, chunk)            # (TB, CPAD)

    # conv bias (padded lanes carry -1e9 so they vanish from the softmax)
    z = pooled + params[0:1, :]                        # (TB, CPAD)

    # Softmax folded into the linear layer:
    #   out = (lin_w . p) / (mask . p) + lin_b, p = exp(z - m)
    m = jnp.max(z, axis=-1, keepdims=True)             # (TB, 1)
    p = jnp.exp(z - m).astype(jnp.bfloat16)            # (TB, CPAD), pad lanes ~0
    lwones = params[1:3, :].astype(jnp.bfloat16)       # (2, CPAD): [lin_w ; mask]
    rows = lax.dot_general(lwones, p, (((1,), (1,)), ((), ())),
                           preferred_element_type=jnp.float32)   # (2, TB)
    lb = params[3:4, 0:1]                              # (1, 1)
    out = rows[0:1, :] * pl.reciprocal(rows[1:2, :], approx=True) + lb  # (1, TB)
    out_ref[...] = out[None]                           # (1, 1, TB) lane-dense store


@functools.partial(jax.jit, static_argnames=("block_b",))
def cnn_stocks_forward(x, conv_w, conv_b, lin_w, lin_b, *, block_b=8192):
    """x: (B, W) f32; conv_w: (C, K); conv_b: (C,); lin_w: (C,); lin_b: ().
    Returns (B,) f32 — matches the PyTorch forward for B > 1."""
    B, W = x.shape
    C, K = conv_w.shape
    T = W - K + 1
    assert T >= 1
    assert C <= CPAD

    # Zero-banded Toeplitz conv weight with 128-lane-padded column groups:
    # column group t holds conv_w^T at rows t..t+K-1 in lanes 0..C-1, zeros
    # elsewhere, so x @ toep computes every conv window in lane-aligned chunks.
    toep = jnp.zeros((W, T * CPAD), dtype=jnp.float32)
    wt = conv_w.T.astype(jnp.float32)                                # (K, C)
    for t in range(T):
        toep = toep.at[t:t + K, t * CPAD:t * CPAD + C].set(wt)
    toep = toep.astype(jnp.bfloat16)

    # All small params in one VMEM block (single DMA, constant index map).
    conv_b_p = jnp.full((CPAD,), -1e9, jnp.float32).at[:C].set(
        jnp.reshape(conv_b, (C,)).astype(jnp.float32))
    lw_p = jnp.zeros((CPAD,), jnp.float32).at[:C].set(
        jnp.reshape(lin_w, (C,)).astype(jnp.float32))
    mask_p = jnp.zeros((CPAD,), jnp.float32).at[:C].set(1.0)
    lb_p = jnp.broadcast_to(jnp.reshape(lin_b, ()).astype(jnp.float32), (CPAD,))
    params = jnp.stack([conv_b_p, lw_p, mask_p, lb_p], axis=0)       # (4, CPAD)

    # Batch tile: multiple of 128 (lane-dense output rows), capped at block_b.
    b128 = _round_up(B, 128)
    tb = min(b128, _round_up(block_b, 128))
    # v7x megacore: if one tile would cover the whole batch, split it in two so
    # both TensorCores get work (only when the half still clears the ~512-row
    # per-grid-step-overhead knee).  No-op on single-TC v5e/v6e.
    if tb == b128 and b128 >= 2 * 512:
        tb = _round_up(b128 // 2, 128)
    b_pad = _round_up(B, tb)
    if b_pad != B:
        x = jnp.pad(x, ((0, b_pad - B), (0, 0)))
    grid = (b_pad // tb,)

    out = pl.pallas_call(
        _cnn_stocks_kernel,
        out_shape=jax.ShapeDtypeStruct((grid[0], 1, tb), jnp.float32),
        grid=grid,
        in_specs=[
            pl.BlockSpec((tb, W), lambda i: (i, 0)),          # x batch tile (pipelined)
            pl.BlockSpec((W, T * CPAD), lambda i: (0, 0)),    # Toeplitz conv weight
            pl.BlockSpec((4, CPAD), lambda i: (0, 0)),        # biases / weights / mask
        ],
        out_specs=pl.BlockSpec((1, 1, tb), lambda i: (i, 0, 0)),
        compiler_params=pltpu.CompilerParams(
            dimension_semantics=("parallel",),
            vmem_limit_bytes=32 * 1024 * 1024),
    )(x, toep, params)

    return out.reshape(b_pad)[:B]


def _reference_forward(x, conv_w, conv_b, lin_w, lin_b):
    """Pure-JAX f32 reference of the PyTorch forward, for correctness check."""
    B, W = x.shape
    C, K = conv_w.shape
    T = W - K + 1
    windows = jnp.stack([x[:, t:t + K] for t in range(T)], axis=1)   # (B, T, K)
    conv = jnp.einsum('btk,ck->bct', windows, conv_w) + conv_b.reshape(1, C, 1)
    pooled = jnp.max(conv, axis=2)                                   # (B, C)
    soft = jax.nn.softmax(pooled, axis=1)
    return soft @ jnp.reshape(lin_w, (C,)) + jnp.reshape(lin_b, ())  # (B,)


if __name__ == "__main__":
    window_length = 16          # small, >= KERNEL_SIZE
    batch = 4

    key = jax.random.PRNGKey(0)
    kx, kw, kb, klw, klb = jax.random.split(key, 5)

    # PyTorch init shapes: Conv1d weight (30, 1, 10) -> folded to (30, 10);
    # Linear weight (1, 30) -> stored (30,); biases (30,) and ().
    x = jax.random.normal(kx, (batch, window_length), dtype=jnp.float32)
    conv_w = jax.random.normal(kw, (OUT_CHANNELS, KERNEL_SIZE), dtype=jnp.float32) * 0.1
    conv_b = jax.random.normal(kb, (OUT_CHANNELS,), dtype=jnp.float32) * 0.1
    lin_w = jax.random.normal(klw, (OUT_CHANNELS,), dtype=jnp.float32) * 0.1
    lin_b = jax.random.normal(klb, (), dtype=jnp.float32) * 0.1

    out = cnn_stocks_forward(x, conv_w, conv_b, lin_w, lin_b)
    out = jax.block_until_ready(out)

    ref = _reference_forward(x, conv_w, conv_b, lin_w, lin_b)
    assert out.shape == (batch,)
    # Tolerance accounts for bf16 MXU operands (f32 accumulation) and the EUP
    # approximate reciprocal in the softmax denominator (~2^-12 rel err); the
    # pure-f32 reference differs by well under these bounds for these scales.
    assert jnp.allclose(out, ref, atol=5e-3, rtol=1e-2), (out, ref)

    print("KERNEL_OK")
</pallas_src>

<mosaic_0001>
module attributes {stable_mosaic.version = 11 : i64} {
  func.func @_cnn_stocks_kernel(%arg0: i32, %arg1: memref<128x16xf32, #tpu.memory_space<vmem>>, %arg2: memref<16x896xbf16, #tpu.memory_space<vmem>>, %arg3: memref<4x128xf32, #tpu.memory_space<vmem>>, %arg4: memref<1x1x128xf32, #tpu.memory_space<vmem>>) attributes {dimension_semantics = [#tpu.dimension_semantics<parallel>], iteration_bounds = array<i64: 1>, scalar_prefetch = 0 : i64, scratch_operands = 0 : i64, tpu.core_type = #tpu.core_type<tc>, window_params = [{transform_indices = @transform_0, window_bounds = array<i64: 128, 16>}, {pipeline_mode = #tpu.pipeline_mode<synchronous>, transform_indices = @transform_1, window_bounds = array<i64: 16, 896>}, {pipeline_mode = #tpu.pipeline_mode<synchronous>, transform_indices = @transform_2, window_bounds = array<i64: 4, 128>}, {transform_indices = @transform_3, window_bounds = array<i64: 1, 1, 128>}]} {
    %c0 = arith.constant 0 : index
    %c0_0 = arith.constant 0 : index
    %0 = vector.load %arg1[%c0, %c0_0] : memref<128x16xf32, #tpu.memory_space<vmem>>, vector<128x16xf32>
    %1 = arith.truncf %0 : vector<128x16xf32> to vector<128x16xbf16>
    %c0_1 = arith.constant 0 : index
    %c0_2 = arith.constant 0 : index
    %2 = vector.load %arg3[%c0_1, %c0_2] : memref<4x128xf32, #tpu.memory_space<vmem>>, vector<4x128xf32>
    %c0_3 = arith.constant 0 : index
    %c0_4 = arith.constant 0 : index
    %3 = vector.load %arg2[%c0_3, %c0_4] : memref<16x896xbf16, #tpu.memory_space<vmem>>, vector<16x128xbf16>
    %cst = arith.constant dense<0.000000e+00> : vector<128x128xf32>
    %4 = tpu.matmul %1, %3, %cst {dimension_numbers = #tpu.dot_dimension_numbers<[1], [0], [0], [1], [0, 0, 1, 1], [], []>} : vector<128x16xbf16>, vector<16x128xbf16>, vector<128x128xf32> -> vector<128x128xf32>
    %c0_5 = arith.constant 0 : index
    %c128 = arith.constant 128 : index
    %5 = vector.load %arg2[%c0_5, %c128] : memref<16x896xbf16, #tpu.memory_space<vmem>>, vector<16x128xbf16>
    %cst_6 = arith.constant dense<0.000000e+00> : vector<128x128xf32>
    %6 = tpu.matmul %1, %5, %cst_6 {dimension_numbers = #tpu.dot_dimension_numbers<[1], [0], [0], [1], [0, 0, 1, 1], [], []>} : vector<128x16xbf16>, vector<16x128xbf16>, vector<128x128xf32> -> vector<128x128xf32>
    %7 = arith.maximumf %4, %6 : vector<128x128xf32>
    %c0_7 = arith.constant 0 : index
    %c256 = arith.constant 256 : index
    %8 = vector.load %arg2[%c0_7, %c256] : memref<16x896xbf16, #tpu.memory_space<vmem>>, vector<16x128xbf16>
    %cst_8 = arith.constant dense<0.000000e+00> : vector<128x128xf32>
    %9 = tpu.matmul %1, %8, %cst_8 {dimension_numbers = #tpu.dot_dimension_numbers<[1], [0], [0], [1], [0, 0, 1, 1], [], []>} : vector<128x16xbf16>, vector<16x128xbf16>, vector<128x128xf32> -> vector<128x128xf32>
    %10 = arith.maximumf %7, %9 : vector<128x128xf32>
    %c0_9 = arith.constant 0 : index
    %c384 = arith.constant 384 : index
    %11 = vector.load %arg2[%c0_9, %c384] : memref<16x896xbf16, #tpu.memory_space<vmem>>, vector<16x128xbf16>
    %cst_10 = arith.constant dense<0.000000e+00> : vector<128x128xf32>
    %12 = tpu.matmul %1, %11, %cst_10 {dimension_numbers = #tpu.dot_dimension_numbers<[1], [0], [0], [1], [0, 0, 1, 1], [], []>} : vector<128x16xbf16>, vector<16x128xbf16>, vector<128x128xf32> -> vector<128x128xf32>
    %13 = arith.maximumf %10, %12 : vector<128x128xf32>
    %c0_11 = arith.constant 0 : index
    %c512 = arith.constant 512 : index
    %14 = vector.load %arg2[%c0_11, %c512] : memref<16x896xbf16, #tpu.memory_space<vmem>>, vector<16x128xbf16>
    %cst_12 = arith.constant dense<0.000000e+00> : vector<128x128xf32>
    %15 = tpu.matmul %1, %14, %cst_12 {dimension_numbers = #tpu.dot_dimension_numbers<[1], [0], [0], [1], [0, 0, 1, 1], [], []>} : vector<128x16xbf16>, vector<16x128xbf16>, vector<128x128xf32> -> vector<128x128xf32>
    %16 = arith.maximumf %13, %15 : vector<128x128xf32>
    %c0_13 = arith.constant 0 : index
    %c640 = arith.constant 640 : index
    %17 = vector.load %arg2[%c0_13, %c640] : memref<16x896xbf16, #tpu.memory_space<vmem>>, vector<16x128xbf16>
    %cst_14 = arith.constant dense<0.000000e+00> : vector<128x128xf32>
    %18 = tpu.matmul %1, %17, %cst_14 {dimension_numbers = #tpu.dot_dimension_numbers<[1], [0], [0], [1], [0, 0, 1, 1], [], []>} : vector<128x16xbf16>, vector<16x128xbf16>, vector<128x128xf32> -> vector<128x128xf32>
    %19 = arith.maximumf %16, %18 : vector<128x128xf32>
    %c0_15 = arith.constant 0 : index
    %c768 = arith.constant 768 : index
    %20 = vector.load %arg2[%c0_15, %c768] : memref<16x896xbf16, #tpu.memory_space<vmem>>, vector<16x128xbf16>
    %cst_16 = arith.constant dense<0.000000e+00> : vector<128x128xf32>
    %21 = tpu.matmul %1, %20, %cst_16 {dimension_numbers = #tpu.dot_dimension_numbers<[1], [0], [0], [1], [0, 0, 1, 1], [], []>} : vector<128x16xbf16>, vector<16x128xbf16>, vector<128x128xf32> -> vector<128x128xf32>
    %22 = arith.maximumf %19, %21 : vector<128x128xf32>
    %23 = vector.extract_strided_slice %2 {offsets = [0, 0], sizes = [1, 128], strides = [1, 1]} : vector<4x128xf32> to vector<1x128xf32>
    %24 = vector.broadcast %23 : vector<1x128xf32> to vector<128x128xf32>
    %25 = arith.addf %22, %24 : vector<128x128xf32>
    %cst_17 = arith.constant dense<0xFF800000> : vector<128xf32>
    %26 = vector.multi_reduction <maximumf>, %25, %cst_17 [1] : vector<128x128xf32> to vector<128xf32>
    %27 = vector.shape_cast %26 : vector<128xf32> to vector<128x1xf32>
    %28 = vector.broadcast %27 : vector<128x1xf32> to vector<128x128xf32>
    %29 = arith.subf %25, %28 : vector<128x128xf32>
    %30 = math.exp %29 : vector<128x128xf32>
    %31 = arith.truncf %30 : vector<128x128xf32> to vector<128x128xbf16>
    %32 = vector.extract_strided_slice %2 {offsets = [1, 0], sizes = [2, 128], strides = [1, 1]} : vector<4x128xf32> to vector<2x128xf32>
    %33 = arith.truncf %32 : vector<2x128xf32> to vector<2x128xbf16>
    %cst_18 = arith.constant dense<0.000000e+00> : vector<2x128xf32>
    %34 = tpu.matmul %33, %31, %cst_18 {dimension_numbers = #tpu.dot_dimension_numbers<[1], [1], [0], [0], [0, 0, 1, 0], [], []>} : vector<2x128xbf16>, vector<128x128xbf16>, vector<2x128xf32> -> vector<2x128xf32>
    %35 = vector.extract_strided_slice %2 {offsets = [3, 0], sizes = [1, 1], strides = [1, 1]} : vector<4x128xf32> to vector<1x1xf32>
    %36 = vector.extract_strided_slice %34 {offsets = [0, 0], sizes = [1, 128], strides = [1, 1]} : vector<2x128xf32> to vector<1x128xf32>
    %37 = vector.extract_strided_slice %34 {offsets = [1, 0], sizes = [1, 128], strides = [1, 1]} : vector<2x128xf32> to vector<1x128xf32>
    %38 = tpu.reciprocal %37 {approx = true} : vector<1x128xf32> -> vector<1x128xf32>
    %39 = arith.mulf %36, %38 : vector<1x128xf32>
    %40 = vector.broadcast %35 : vector<1x1xf32> to vector<1x128xf32>
    %41 = arith.addf %39, %40 : vector<1x128xf32>
    %42 = vector.shape_cast %41 : vector<1x128xf32> to vector<1x1x128xf32>
    %c0_19 = arith.constant 0 : index
    %c0_20 = arith.constant 0 : index
    %c0_21 = arith.constant 0 : index
    %43 = vector.load %arg4[%c0_19, %c0_20, %c0_21] : memref<1x1x128xf32, #tpu.memory_space<vmem>>, vector<1x1x128xf32>
    tpu.vector_store %arg4[%c0_19, %c0_20, %c0_21], %42 {strides = array<i32>} : memref<1x1x128xf32, #tpu.memory_space<vmem>>, vector<1x1x128xf32>,
    return
  }
  func.func @transform_0(%arg0: i32) -> (i32, i32) {
    %c0_i32 = arith.constant 0 : i32
    %c0_i32_0 = arith.constant 0 : i32
    return %arg0, %c0_i32 : i32, i32
  }
  func.func @transform_1(%arg0: i32) -> (i32, i32) {
    %c0_i32 = arith.constant 0 : i32
    %c0_i32_0 = arith.constant 0 : i32
    %c0_i32_1 = arith.constant 0 : i32
    return %c0_i32, %c0_i32_0 : i32, i32
  }
  func.func @transform_2(%arg0: i32) -> (i32, i32) {
    %c0_i32 = arith.constant 0 : i32
    %c0_i32_0 = arith.constant 0 : i32
    %c0_i32_1 = arith.constant 0 : i32
    return %c0_i32, %c0_i32_0 : i32, i32
  }
  func.func @transform_3(%arg0: i32) -> (i32, i32, i32) {
    %c0_i32 = arith.constant 0 : i32
    %c0_i32_0 = arith.constant 0 : i32
    %c0_i32_1 = arith.constant 0 : i32
    return %arg0, %c0_i32, %c0_i32_0 : i32, i32, i32
  }
}

</mosaic_0001>

<llo_original>
// kernel: cnn_stocks_forward.1
$region0: #{cnn_stocks_forward.1}
  #allocation0 [shape = 'u32[]', space=smem, size = 0x4, offset = 0x4, fixed_abs, tag = 'smem constant byte address 0x4 - core index']
  #allocation1 [shape = 'u32[72,128]{1,0:T(1,128)}', space=vmem, size = 0x9000, scoped, tag = 'internal scratch']
  %s0 = inlined_call_operand.vmem [shape: f32[128,16], index: 0, kind: input, shape index: {}]
  %s1 = inlined_call_operand.vmem [shape: bf16[16,896], index: 1, kind: input, shape index: {}]
  %s2 = inlined_call_operand.vmem [shape: f32[4,128], index: 2, kind: input, shape index: {}]
  %s3 = inlined_call_operand.vmem [shape: f32[1,1,128], index: 3, kind: output, shape index: {}]
  %s4 = sld [smem:[#allocation0]]
  $region22: #{cnn_stocks_forward.1} parent=0
    _
  %s6 = ssub.s32 1, %s4
  %s7 = scalar_select 0, %s6, %s4
  // Predicated region
  $region2: #{cnn_stocks_forward.1} parent=0 // pred_check
    _
  $region3: #{cnn_stocks_forward.1} parent=0 // pred_check_branch
    %9 = sbr.rel (0) target = $region5
  $region4: #{cnn_stocks_forward.1} parent=0 // pred_region
    _
  $region5: #{cnn_stocks_forward.1} parent=0 // pred_fallthru
    _
  // Predicated region
  $region6: #{cnn_stocks_forward.1} parent=0 // pred_check
    _
  $region7: #{cnn_stocks_forward.1} parent=0 // pred_check_branch
    %11 = sbr.rel (0) target = $region9
  $region8: #{cnn_stocks_forward.1} parent=0 // pred_region
    _
  $region9: #{cnn_stocks_forward.1} parent=0 // pred_fallthru
    _
  // Predicated region
  $region10: #{cnn_stocks_forward.1} parent=0 // pred_check
    _
  $region11: #{cnn_stocks_forward.1} parent=0 // pred_check_branch
    %13 = sbr.rel (0) target = $region13
  $region12: #{cnn_stocks_forward.1} parent=0 // pred_region
    _
  $region13: #{cnn_stocks_forward.1} parent=0 // pred_fallthru
    _
  %v15 = vld [vmem:[%s0] sm:$0xff]
  %v16 = vld [vmem:[%s0 + $0x8] sm:$0xff]
  %v17 = vld [vmem:[%s0 + $0x10] sm:$0xff]
  %v18 = vld [vmem:[%s0 + $0x18] sm:$0xff]
  %v19 = vld [vmem:[%s0 + $0x20] sm:$0xff]
  %v20 = vld [vmem:[%s0 + $0x28] sm:$0xff]
  %v21 = vld [vmem:[%s0 + $0x30] sm:$0xff]
  %v22 = vld [vmem:[%s0 + $0x38] sm:$0xff]
  %v23 = vld [vmem:[%s0 + $0x40] sm:$0xff]
  %v24 = vld [vmem:[%s0 + $0x48] sm:$0xff]
  %v25 = vld [vmem:[%s0 + $0x50] sm:$0xff]
  %v26 = vld [vmem:[%s0 + $0x58] sm:$0xff]
  %v27 = vld [vmem:[%s0 + $0x60] sm:$0xff]
  %v28 = vld [vmem:[%s0 + $0x68] sm:$0xff]
  %v29 = vld [vmem:[%s0 + $0x70] sm:$0xff]
  %v30 = vld [vmem:[%s0 + $0x78] sm:$0xff]
  %v31 = vpack.c.bf16 %v16, %v15
  %v32 = vpack.c.bf16 %v18, %v17
  %v33 = vpack.c.bf16 %v20, %v19
  %v34 = vpack.c.bf16 %v22, %v21
  %v35 = vpack.c.bf16 %v24, %v23
  %v36 = vpack.c.bf16 %v26, %v25
  %v37 = vpack.c.bf16 %v28, %v27
  %v38 = vpack.c.bf16 %v30, %v29
  %v39 = vld [vmem:[%s2] sm:$0xf]
  %v40 = vld [vmem:[%s1] sm:$0xf]
  %v41 = vld [vmem:[%s1 + $0x1c] sm:$0xf]
  %v44 = vunpack.c.l.b16 %v40
  %v45 = vunpack.c.l.b16 %v41
  %v46 = vpack.c.b16 %v45, %v44
  %vm48 = vcmask 130048
  %v50 = vsel %vm48, %v31, 0
  %v53 = vsel %vm48, %v32, 0
  %v56 = vsel %vm48, %v33, 0
  %v59 = vsel %vm48, %v34, 0
  %v62 = vsel %vm48, %v35, 0
  %v65 = vsel %vm48, %v36, 0
  %v68 = vsel %vm48, %v37, 0
  %v71 = vsel %vm48, %v38, 0
  %73 = vmatpush.bf16.msra.mxu0 0
  %74 = vmatpush.bf16.msra.mxu0 0
  %75 = vmatpush.bf16.msra.mxu0 0
  %76 = vmatpush.bf16.msra.mxu0 0
  %77 = vmatpush.bf16.msra.mxu0 0
  %78 = vmatpush.bf16.msra.mxu0 0
  %79 = vmatpush.bf16.msra.mxu0 0
  %80 = vmatpush.bf16.msra.mxu0 %v46
  %81 = vmatmul.bf16.gmra.mxu0 %v50
  %v82 = vpop.f32.mrf.mxu0
  %v83 = vadd.f32 0.0, %v82
  %v84 = vpop.f32.mrf.mxu0
  %v85 = vadd.f32 0.0, %v84
  %86 = vmatmul.bf16.gmra.mxu0 %v53
  %v87 = vpop.f32.mrf.mxu0
  %v88 = vadd.f32 0.0, %v87
  %v89 = vpop.f32.mrf.mxu0
  %v90 = vadd.f32 0.0, %v89
  %91 = vmatmul.bf16.gmra.mxu0 %v56
  %v92 = vpop.f32.mrf.mxu0
  %v93 = vadd.f32 0.0, %v92
  %v94 = vpop.f32.mrf.mxu0
  %v95 = vadd.f32 0.0, %v94
  %96 = vmatmul.bf16.gmra.mxu0 %v59
  %v97 = vpop.f32.mrf.mxu0
  %v98 = vadd.f32 0.0, %v97
  %v99 = vpop.f32.mrf.mxu0
  %v100 = vadd.f32 0.0, %v99
  %101 = vmatmul.bf16.gmra.mxu0 %v62
  %v102 = vpop.f32.mrf.mxu0
  %v103 = vadd.f32 0.0, %v102
  %v104 = vpop.f32.mrf.mxu0
  %v105 = vadd.f32 0.0, %v104
  %106 = vmatmul.bf16.gmra.mxu0 %v65
  %v107 = vpop.f32.mrf.mxu0
  %v108 = vadd.f32 0.0, %v107
  %v109 = vpop.f32.mrf.mxu0
  %v110 = vadd.f32 0.0, %v109
  %111 = vmatmul.bf16.gmra.mxu0 %v68
  %v112 = vpop.f32.mrf.mxu0
  %v113 = vadd.f32 0.0, %v112
  %v114 = vpop.f32.mrf.mxu0
  %v115 = vadd.f32 0.0, %v114
  %116 = vmatmul.bf16.gmra.mxu0 %v71
  %v117 = vpop.f32.mrf.mxu0
  %v118 = vadd.f32 0.0, %v117
  %v119 = vpop.f32.mrf.mxu0
  %v120 = vadd.f32 0.0, %v119
  %121 = vdwg.mxu0
  %v122 = vld [vmem:[%s1 + $0x4] sm:$0xf]
  %v123 = vld [vmem:[%s1 + $0x20] sm:$0xf]
  %v126 = vunpack.c.l.b16 %v122
  %v127 = vunpack.c.l.b16 %v123
  %v128 = vpack.c.b16 %v127, %v126
  %130 = vmatpush.bf16.msra.mxu0 0
  %131 = vmatpush.bf16.msra.mxu0 0
  %132 = vmatpush.bf16.msra.mxu0 0
  %133 = vmatpush.bf16.msra.mxu0 0
  %134 = vmatpush.bf16.msra.mxu0 0
  %135 = vmatpush.bf16.msra.mxu0 0
  %136 = vmatpush.bf16.msra.mxu0 0
  %137 = vmatpush.bf16.msra.mxu0 %v128
  %138 = vmatmul.bf16.gmra.mxu0 %v50
  %v139 = vpop.f32.mrf.mxu0
  %v140 = vadd.f32 0.0, %v139
  %v141 = vpop.f32.mrf.mxu0
  %v142 = vadd.f32 0.0, %v141
  %143 = vmatmul.bf16.gmra.mxu0 %v53
  %v144 = vpop.f32.mrf.mxu0
  %v145 = vadd.f32 0.0, %v144
  %v146 = vpop.f32.mrf.mxu0
  %v147 = vadd.f32 0.0, %v146
  %148 = vmatmul.bf16.gmra.mxu0 %v56
  %v149 = vpop.f32.mrf.mxu0
  %v150 = vadd.f32 0.0, %v149
  %v151 = vpop.f32.mrf.mxu0
  %v152 = vadd.f32 0.0, %v151
  %153 = vmatmul.bf16.gmra.mxu0 %v59
  %v154 = vpop.f32.mrf.mxu0
  %v155 = vadd.f32 0.0, %v154
  %v156 = vpop.f32.mrf.mxu0
  %v157 = vadd.f32 0.0, %v156
  %158 = vmatmul.bf16.gmra.mxu0 %v62
  %v159 = vpop.f32.mrf.mxu0
  %v160 = vadd.f32 0.0, %v159
  %v161 = vpop.f32.mrf.mxu0
  %v162 = vadd.f32 0.0, %v161
  %163 = vmatmul.bf16.gmra.mxu0 %v65
  %v164 = vpop.f32.mrf.mxu0
  %v165 = vadd.f32 0.0, %v164
  %v166 = vpop.f32.mrf.mxu0
  %v167 = vadd.f32 0.0, %v166
  %168 = vmatmul.bf16.gmra.mxu0 %v68
  %v169 = vpop.f32.mrf.mxu0
  %v170 = vadd.f32 0.0, %v169
  %v171 = vpop.f32.mrf.mxu0
  %v172 = vadd.f32 0.0, %v171
  %173 = vmatmul.bf16.gmra.mxu0 %v71
  %v174 = vpop.f32.mrf.mxu0
  %v175 = vadd.f32 0.0, %v174
  %v176 = vpop.f32.mrf.mxu0
  %v177 = vadd.f32 0.0, %v176
  %178 = vdwg.mxu0
  %v179 = vmax.f32 %v83, %v140
  %v180 = vmax.f32 %v85, %v142
  %v181 = vmax.f32 %v88, %v145
  %v182 = vmax.f32 %v90, %v147
  %v183 = vmax.f32 %v93, %v150
  %v184 = vmax.f32 %v95, %v152
  %v185 = vmax.f32 %v98, %v155
  %v186 = vmax.f32 %v100, %v157
  %v187 = vmax.f32 %v103, %v160
  %v188 = vmax.f32 %v105, %v162
  %v189 = vmax.f32 %v108, %v165
  %v190 = vmax.f32 %v110, %v167
  %v191 = vmax.f32 %v113, %v170
  %v192 = vmax.f32 %v115, %v172
  %v193 = vmax.f32 %v118, %v175
  %v194 = vmax.f32 %v120, %v177
  %v195 = vld [vmem:[%s1 + $0x8] sm:$0xf]
  %v196 = vld [vmem:[%s1 + $0x24] sm:$0xf]
  %v199 = vunpack.c.l.b16 %v195
  %v200 = vunpack.c.l.b16 %v196
  %v201 = vpack.c.b16 %v200, %v199
  %203 = vmatpush.bf16.msra.mxu0 0
  %204 = vmatpush.bf16.msra.mxu0 0
  %205 = vmatpush.bf16.msra.mxu0 0
  %206 = vmatpush.bf16.msra.mxu0 0
  %207 = vmatpush.bf16.msra.mxu0 0
  %208 = vmatpush.bf16.msra.mxu0 0
  %209 = vmatpush.bf16.msra.mxu0 0
  %210 = vmatpush.bf16.msra.mxu0 %v201
  %211 = vmatmul.bf16.gmra.mxu0 %v50
  %v212 = vpop.f32.mrf.mxu0
  %v213 = vadd.f32 0.0, %v212
  %v214 = vpop.f32.mrf.mxu0
  %v215 = vadd.f32 0.0, %v214
  %216 = vmatmul.bf16.gmra.mxu0 %v53
  %v217 = vpop.f32.mrf.mxu0
  %v218 = vadd.f32 0.0, %v217
  %v219 = vpop.f32.mrf.mxu0
  %v220 = vadd.f32 0.0, %v219
  %221 = vmatmul.bf16.gmra.mxu0 %v56
  %v222 = vpop.f32.mrf.mxu0
  %v223 = vadd.f32 0.0, %v222
  %v224 = vpop.f32.mrf.mxu0
  %v225 = vadd.f32 0.0, %v224
  %226 = vmatmul.bf16.gmra.mxu0 %v59
  %v227 = vpop.f32.mrf.mxu0
  %v228 = vadd.f32 0.0, %v227
  %v229 = vpop.f32.mrf.mxu0
  %v230 = vadd.f32 0.0, %v229
  %231 = vmatmul.bf16.gmra.mxu0 %v62
  %v232 = vpop.f32.mrf.mxu0
  %v233 = vadd.f32 0.0, %v232
  %v234 = vpop.f32.mrf.mxu0
  %v235 = vadd.f32 0.0, %v234
  %236 = vmatmul.bf16.gmra.mxu0 %v65
  %v237 = vpop.f32.mrf.mxu0
  %v238 = vadd.f32 0.0, %v237
  %v239 = vpop.f32.mrf.mxu0
  %v240 = vadd.f32 0.0, %v239
  %241 = vmatmul.bf16.gmra.mxu0 %v68
  %v242 = vpop.f32.mrf.mxu0
  %v243 = vadd.f32 0.0, %v242
  %v244 = vpop.f32.mrf.mxu0
  %v245 = vadd.f32 0.0, %v244
  %246 = vmatmul.bf16.gmra.mxu0 %v71
  %v247 = vpop.f32.mrf.mxu0
  %v248 = vadd.f32 0.0, %v247
  %v249 = vpop.f32.mrf.mxu0
  %v250 = vadd.f32 0.0, %v249
  %251 = vdwg.mxu0
  %v252 = vmax.f32 %v179, %v213
  %v253 = vmax.f32 %v180, %v215
  %v254 = vmax.f32 %v181, %v218
  %v255 = vmax.f32 %v182, %v220
  %v256 = vmax.f32 %v183, %v223
  %v257 = vmax.f32 %v184, %v225
  %v258 = vmax.f32 %v185, %v228
  %v259 = vmax.f32 %v186, %v230
  %v260 = vmax.f32 %v187, %v233
  %v261 = vmax.f32 %v188, %v235
  %v262 = vmax.f32 %v189, %v238
  %v263 = vmax.f32 %v190, %v240
  %v264 = vmax.f32 %v191, %v243
  %v265 = vmax.f32 %v192, %v245
  %v266 = vmax.f32 %v193, %v248
  %v267 = vmax.f32 %v194, %v250
  %v268 = vld [vmem:[%s1 + $0xc] sm:$0xf]
  %v269 = vld [vmem:[%s1 + $0x28] sm:$0xf]
  %v272 = vunpack.c.l.b16 %v268
  %v273 = vunpack.c.l.b16 %v269
  %v274 = vpack.c.b16 %v273, %v272
  %276 = vmatpush.bf16.msra.mxu0 0
  %277 = vmatpush.bf16.msra.mxu0 0
  %278 = vmatpush.bf16.msra.mxu0 0
  %279 = vmatpush.bf16.msra.mxu0 0
  %280 = vmatpush.bf16.msra.mxu0 0
  %281 = vmatpush.bf16.msra.mxu0 0
  %282 = vmatpush.bf16.msra.mxu0 0
  %283 = vmatpush.bf16.msra.mxu0 %v274
  %284 = vmatmul.bf16.gmra.mxu0 %v50
  %v285 = vpop.f32.mrf.mxu0
  %v286 = vadd.f32 0.0, %v285
  %v287 = vpop.f32.mrf.mxu0
  %v288 = vadd.f32 0.0, %v287
  %289 = vmatmul.bf16.gmra.mxu0 %v53
  %v290 = vpop.f32.mrf.mxu0
  %v291 = vadd.f32 0.0, %v290
  %v292 = vpop.f32.mrf.mxu0
  %v293 = vadd.f32 0.0, %v292
  %294 = vmatmul.bf16.gmra.mxu0 %v56
  %v295 = vpop.f32.mrf.mxu0
  %v296 = vadd.f32 0.0, %v295
  %v297 = vpop.f32.mrf.mxu0
  %v298 = vadd.f32 0.0, %v297
  %299 = vmatmul.bf16.gmra.mxu0 %v59
  %v300 = vpop.f32.mrf.mxu0
  %v301 = vadd.f32 0.0, %v300
  %v302 = vpop.f32.mrf.mxu0
  %v303 = vadd.f32 0.0, %v302
  %304 = vmatmul.bf16.gmra.mxu0 %v62
  %v305 = vpop.f32.mrf.mxu0
  %v306 = vadd.f32 0.0, %v305
  %v307 = vpop.f32.mrf.mxu0
  %v308 = vadd.f32 0.0, %v307
  %309 = vmatmul.bf16.gmra.mxu0 %v65
  %v310 = vpop.f32.mrf.mxu0
  %v311 = vadd.f32 0.0, %v310
  %v312 = vpop.f32.mrf.mxu0
  %v313 = vadd.f32 0.0, %v312
  %314 = vmatmul.bf16.gmra.mxu0 %v68
  %v315 = vpop.f32.mrf.mxu0
  %v316 = vadd.f32 0.0, %v315
  %v317 = vpop.f32.mrf.mxu0
  %v318 = vadd.f32 0.0, %v317
  %319 = vmatmul.bf16.gmra.mxu0 %v71
  %v320 = vpop.f32.mrf.mxu0
  %v321 = vadd.f32 0.0, %v320
  %v322 = vpop.f32.mrf.mxu0
  %v323 = vadd.f32 0.0, %v322
  %324 = vdwg.mxu0
  %v325 = vmax.f32 %v252, %v286
  %v326 = vmax.f32 %v253, %v288
  %v327 = vmax.f32 %v254, %v291
  %v328 = vmax.f32 %v255, %v293
  %v329 = vmax.f32 %v256, %v296
  %v330 = vmax.f32 %v257, %v298
  %v331 = vmax.f32 %v258, %v301
  %v332 = vmax.f32 %v259, %v303
  %v333 = vmax.f32 %v260, %v306
  %v334 = vmax.f32 %v261, %v308
  %v335 = vmax.f32 %v262, %v311
  %v336 = vmax.f32 %v263, %v313
  %v337 = vmax.f32 %v264, %v316
  %v338 = vmax.f32 %v265, %v318
  %v339 = vmax.f32 %v266, %v321
  %v340 = vmax.f32 %v267, %v323
  %v341 = vld [vmem:[%s1 + $0x10] sm:$0xf]
  %v342 = vld [vmem:[%s1 + $0x2c] sm:$0xf]
  %v345 = vunpack.c.l.b16 %v341
  %v346 = vunpack.c.l.b16 %v342
  %v347 = vpack.c.b16 %v346, %v345
  %349 = vmatpush.bf16.msra.mxu0 0
  %350 = vmatpush.bf16.msra.mxu0 0
  %351 = vmatpush.bf16.msra.mxu0 0
  %352 = vmatpush.bf16.msra.mxu0 0
  %353 = vmatpush.bf16.msra.mxu0 0
  %354 = vmatpush.bf16.msra.mxu0 0
  %355 = vmatpush.bf16.msra.mxu0 0
  %356 = vmatpush.bf16.msra.mxu0 %v347
  %357 = vmatmul.bf16.gmra.mxu0 %v50
  %v358 = vpop.f32.mrf.mxu0
  %v359 = vadd.f32 0.0, %v358
  %v360 = vpop.f32.mrf.mxu0
  %v361 = vadd.f32 0.0, %v360
  %362 = vmatmul.bf16.gmra.mxu0 %v53
  %v363 = vpop.f32.mrf.mxu0
  %v364 = vadd.f32 0.0, %v363
  %v365 = vpop.f32.mrf.mxu0
  %v366 = vadd.f32 0.0, %v365
  %367 = vmatmul.bf16.gmra.mxu0 %v56
  %v368 = vpop.f32.mrf.mxu0
  %v369 = vadd.f32 0.0, %v368
  %v370 = vpop.f32.mrf.mxu0
  %v371 = vadd.f32 0.0, %v370
  %372 = vmatmul.bf16.gmra.mxu0 %v59
  %v373 = vpop.f32.mrf.mxu0
  %v374 = vadd.f32 0.0, %v373
  %v375 = vpop.f32.mrf.mxu0
  %v376 = vadd.f32 0.0, %v375
  %377 = vmatmul.bf16.gmra.mxu0 %v62
  %v378 = vpop.f32.mrf.mxu0
  %v379 = vadd.f32 0.0, %v378
  %v380 = vpop.f32.mrf.mxu0
  %v381 = vadd.f32 0.0, %v380
  %382 = vmatmul.bf16.gmra.mxu0 %v65
  %v383 = vpop.f32.mrf.mxu0
  %v384 = vadd.f32 0.0, %v383
  %v385 = vpop.f32.mrf.mxu0
  %v386 = vadd.f32 0.0, %v385
  %387 = vmatmul.bf16.gmra.mxu0 %v68
  %v388 = vpop.f32.mrf.mxu0
  %v389 = vadd.f32 0.0, %v388
  %v390 = vpop.f32.mrf.mxu0
  %v391 = vadd.f32 0.0, %v390
  %392 = vmatmul.bf16.gmra.mxu0 %v71
  %v393 = vpop.f32.mrf.mxu0
  %v394 = vadd.f32 0.0, %v393
  %v395 = vpop.f32.mrf.mxu0
  %v396 = vadd.f32 0.0, %v395
  %397 = vdwg.mxu0
  %v398 = vmax.f32 %v325, %v359
  %v399 = vmax.f32 %v326, %v361
  %v400 = vmax.f32 %v327, %v364
  %v401 = vmax.f32 %v328, %v366
  %v402 = vmax.f32 %v329, %v369
  %v403 = vmax.f32 %v330, %v371
  %v404 = vmax.f32 %v331, %v374
  %v405 = vmax.f32 %v332, %v376
  %v406 = vmax.f32 %v333, %v379
  %v407 = vmax.f32 %v334, %v381
  %v408 = vmax.f32 %v335, %v384
  %v409 = vmax.f32 %v336, %v386
  %v410 = vmax.f32 %v337, %v389
  %v411 = vmax.f32 %v338, %v391
  %v412 = vmax.f32 %v339, %v394
  %v413 = vmax.f32 %v340, %v396
  %v414 = vld [vmem:[%s1 + $0x14] sm:$0xf]
  %v415 = vld [vmem:[%s1 + $0x30] sm:$0xf]
  %v418 = vunpack.c.l.b16 %v414
  %v419 = vunpack.c.l.b16 %v415
  %v420 = vpack.c.b16 %v419, %v418
  %422 = vmatpush.bf16.msra.mxu0 0
  %423 = vmatpush.bf16.msra.mxu0 0
  %424 = vmatpush.bf16.msra.mxu0 0
  %425 = vmatpush.bf16.msra.mxu0 0
  %426 = vmatpush.bf16.msra.mxu0 0
  %427 = vmatpush.bf16.msra.mxu0 0
  %428 = vmatpush.bf16.msra.mxu0 0
  %429 = vmatpush.bf16.msra.mxu0 %v420
  %430 = vmatmul.bf16.gmra.mxu0 %v50
  %v431 = vpop.f32.mrf.mxu0
  %v432 = vadd.f32 0.0, %v431
  %v433 = vpop.f32.mrf.mxu0
  %v434 = vadd.f32 0.0, %v433
  %435 = vmatmul.bf16.gmra.mxu0 %v53
  %v436 = vpop.f32.mrf.mxu0
  %v437 = vadd.f32 0.0, %v436
  %v438 = vpop.f32.mrf.mxu0
  %v439 = vadd.f32 0.0, %v438
  %440 = vmatmul.bf16.gmra.mxu0 %v56
  %v441 = vpop.f32.mrf.mxu0
  %v442 = vadd.f32 0.0, %v441
  %v443 = vpop.f32.mrf.mxu0
  %v444 = vadd.f32 0.0, %v443
  %445 = vmatmul.bf16.gmra.mxu0 %v59
  %v446 = vpop.f32.mrf.mxu0
  %v447 = vadd.f32 0.0, %v446
  %v448 = vpop.f32.mrf.mxu0
  %v449 = vadd.f32 0.0, %v448
  %450 = vmatmul.bf16.gmra.mxu0 %v62
  %v451 = vpop.f32.mrf.mxu0
  %v452 = vadd.f32 0.0, %v451
  %v453 = vpop.f32.mrf.mxu0
  %v454 = vadd.f32 0.0, %v453
  %455 = vmatmul.bf16.gmra.mxu0 %v65
  %v456 = vpop.f32.mrf.mxu0
  %v457 = vadd.f32 0.0, %v456
  %v458 = vpop.f32.mrf.mxu0
  %v459 = vadd.f32 0.0, %v458
  %460 = vmatmul.bf16.gmra.mxu0 %v68
  %v461 = vpop.f32.mrf.mxu0
  %v462 = vadd.f32 0.0, %v461
  %v463 = vpop.f32.mrf.mxu0
  %v464 = vadd.f32 0.0, %v463
  %465 = vmatmul.bf16.gmra.mxu0 %v71
  %v466 = vpop.f32.mrf.mxu0
  %v467 = vadd.f32 0.0, %v466
  %v468 = vpop.f32.mrf.mxu0
  %v469 = vadd.f32 0.0, %v468
  %470 = vdwg.mxu0
  %v471 = vmax.f32 %v398, %v432
  %v472 = vmax.f32 %v399, %v434
  %v473 = vmax.f32 %v400, %v437
  %v474 = vmax.f32 %v401, %v439
  %v475 = vmax.f32 %v402, %v442
  %v476 = vmax.f32 %v403, %v444
  %v477 = vmax.f32 %v404, %v447
  %v478 = vmax.f32 %v405, %v449
  %v479 = vmax.f32 %v406, %v452
  %v480 = vmax.f32 %v407, %v454
  %v481 = vmax.f32 %v408, %v457
  %v482 = vmax.f32 %v409, %v459
  %v483 = vmax.f32 %v410, %v462
  %v484 = vmax.f32 %v411, %v464
  %v485 = vmax.f32 %v412, %v467
  %v486 = vmax.f32 %v413, %v469
  %v487 = vld [vmem:[%s1 + $0x18] sm:$0xf]
  %v488 = vld [vmem:[%s1 + $0x34] sm:$0xf]
  %v491 = vunpack.c.l.b16 %v487
  %v492 = vunpack.c.l.b16 %v488
  %v493 = vpack.c.b16 %v492, %v491
  %495 = vmatpush.bf16.msra.mxu0 0
  %496 = vmatpush.bf16.msra.mxu0 0
  %497 = vmatpush.bf16.msra.mxu0 0
  %498 = vmatpush.bf16.msra.mxu0 0
  %499 = vmatpush.bf16.msra.mxu0 0
  %500 = vmatpush.bf16.msra.mxu0 0
  %501 = vmatpush.bf16.msra.mxu0 0
  %502 = vmatpush.bf16.msra.mxu0 %v493
  %503 = vmatmul.bf16.gmra.mxu0 %v50
  %v504 = vpop.f32.mrf.mxu0
  %v505 = vadd.f32 0.0, %v504
  %v506 = vpop.f32.mrf.mxu0
  %v507 = vadd.f32 0.0, %v506
  %508 = vmatmul.bf16.gmra.mxu0 %v53
  %v509 = vpop.f32.mrf.mxu0
  %v510 = vadd.f32 0.0, %v509
  %v511 = vpop.f32.mrf.mxu0
  %v512 = vadd.f32 0.0, %v511
  %513 = vmatmul.bf16.gmra.mxu0 %v56
  %v514 = vpop.f32.mrf.mxu0
  %v515 = vadd.f32 0.0, %v514
  %v516 = vpop.f32.mrf.mxu0
  %v517 = vadd.f32 0.0, %v516
  %518 = vmatmul.bf16.gmra.mxu0 %v59
  %v519 = vpop.f32.mrf.mxu0
  %v520 = vadd.f32 0.0, %v519
  %v521 = vpop.f32.mrf.mxu0
  %v522 = vadd.f32 0.0, %v521
  %523 = vmatmul.bf16.gmra.mxu0 %v62
  %v524 = vpop.f32.mrf.mxu0
  %v525 = vadd.f32 0.0, %v524
  %v526 = vpop.f32.mrf.mxu0
  %v527 = vadd.f32 0.0, %v526
  %528 = vmatmul.bf16.gmra.mxu0 %v65
  %v529 = vpop.f32.mrf.mxu0
  %v530 = vadd.f32 0.0, %v529
  %v531 = vpop.f32.mrf.mxu0
  %v532 = vadd.f32 0.0, %v531
  %533 = vmatmul.bf16.gmra.mxu0 %v68
  %v534 = vpop.f32.mrf.mxu0
  %v535 = vadd.f32 0.0, %v534
  %v536 = vpop.f32.mrf.mxu0
  %v537 = vadd.f32 0.0, %v536
  %538 = vmatmul.bf16.gmra.mxu0 %v71
  %v539 = vpop.f32.mrf.mxu0
  %v540 = vadd.f32 0.0, %v539
  %v541 = vpop.f32.mrf.mxu0
  %v542 = vadd.f32 0.0, %v541
  %543 = vdwg.mxu0
  %v544 = vmax.f32 %v471, %v505
  %v545 = vmax.f32 %v472, %v507
  %v546 = vmax.f32 %v473, %v510
  %v547 = vmax.f32 %v474, %v512
  %v548 = vmax.f32 %v475, %v515
  %v549 = vmax.f32 %v476, %v517
  %v550 = vmax.f32 %v477, %v520
  %v551 = vmax.f32 %v478, %v522
  %v552 = vmax.f32 %v479, %v525
  %v553 = vmax.f32 %v480, %v527
  %v554 = vmax.f32 %v481, %v530
  %v555 = vmax.f32 %v482, %v532
  %v556 = vmax.f32 %v483, %v535
  %v557 = vmax.f32 %v484, %v537
  %v558 = vmax.f32 %v485, %v540
  %v559 = vmax.f32 %v486, %v542
  %v560 = vperm.slane %v39, 0
  %v561 = vadd.f32 %v544, %v560
  %v562 = vadd.f32 %v545, %v560
  %v563 = vadd.f32 %v546, %v560
  %v564 = vadd.f32 %v547, %v560
  %v565 = vadd.f32 %v548, %v560
  %v566 = vadd.f32 %v549, %v560
  %v567 = vadd.f32 %v550, %v560
  %v568 = vadd.f32 %v551, %v560
  %v569 = vadd.f32 %v552, %v560
  %v570 = vadd.f32 %v553, %v560
  %v571 = vadd.f32 %v554, %v560
  %v572 = vadd.f32 %v555, %v560
  %v573 = vadd.f32 %v556, %v560
  %v574 = vadd.f32 %v557, %v560
  %v575 = vadd.f32 %v558, %v560
  %v576 = vadd.f32 %v559, %v560
  %577 = vmax.xlane.f32.xlu0 %v561
  %v578 = vpop.xlane.xlu0 %577
  %579 = vmax.xlane.f32.xlu0 %v562
  %v580 = vpop.xlane.xlu0 %579
  %581 = vmax.xlane.f32.xlu0 %v563
  %v582 = vpop.xlane.xlu0 %581
  %583 = vmax.xlane.f32.xlu0 %v564
  %v584 = vpop.xlane.xlu0 %583
  %585 = vmax.xlane.f32.xlu0 %v565
  %v586 = vpop.xlane.xlu0 %585
  %587 = vmax.xlane.f32.xlu0 %v566
  %v588 = vpop.xlane.xlu0 %587
  %589 = vmax.xlane.f32.xlu0 %v567
  %v590 = vpop.xlane.xlu0 %589
  %591 = vmax.xlane.f32.xlu0 %v568
  %v592 = vpop.xlane.xlu0 %591
  %593 = vmax.xlane.f32.xlu0 %v569
  %v594 = vpop.xlane.xlu0 %593
  %595 = vmax.xlane.f32.xlu0 %v570
  %v596 = vpop.xlane.xlu0 %595
  %597 = vmax.xlane.f32.xlu0 %v571
  %v598 = vpop.xlane.xlu0 %597
  %599 = vmax.xlane.f32.xlu0 %v572
  %v600 = vpop.xlane.xlu0 %599
  %601 = vmax.xlane.f32.xlu0 %v573
  %v602 = vpop.xlane.xlu0 %601
  %603 = vmax.xlane.f32.xlu0 %v574
  %v604 = vpop.xlane.xlu0 %603
  %605 = vmax.xlane.f32.xlu0 %v575
  %v606 = vpop.xlane.xlu0 %605
  %607 = vmax.xlane.f32.xlu0 %v576
  %v608 = vpop.xlane.xlu0 %607
  %v609 = vsub.f32 %v561, %v578
  %v610 = vsub.f32 %v562, %v580
  %v611 = vsub.f32 %v563, %v582
  %v612 = vsub.f32 %v564, %v584
  %v613 = vsub.f32 %v565, %v586
  %v614 = vsub.f32 %v566, %v588
  %v615 = vsub.f32 %v567, %v590
  %v616 = vsub.f32 %v568, %v592
  %v617 = vsub.f32 %v569, %v594
  %v618 = vsub.f32 %v570, %v596
  %v619 = vsub.f32 %v571, %v598
  %v620 = vsub.f32 %v572, %v600
  %v621 = vsub.f32 %v573, %v602
  %v622 = vsub.f32 %v574, %v604
  %v623 = vsub.f32 %v575, %v606
  %v624 = vsub.f32 %v576, %v608
  %v625 = vmul.f32 %v609, 1.442695
  %v626 = vpow.pop %v625
  %v627 = vmul.f32 %v610, 1.442695
  %v628 = vpow.pop %v627
  %v629 = vmul.f32 %v611, 1.442695
  %v630 = vpow.pop %v629
  %v631 = vmul.f32 %v612, 1.442695
  %v632 = vpow.pop %v631
  %v633 = vmul.f32 %v613, 1.442695
  %v634 = vpow.pop %v633
  %v635 = vmul.f32 %v614, 1.442695
  %v636 = vpow.pop %v635
  %v637 = vmul.f32 %v615, 1.442695
  %v638 = vpow.pop %v637
  %v639 = vmul.f32 %v616, 1.442695
  %v640 = vpow.pop %v639
  %v641 = vmul.f32 %v617, 1.442695
  %v642 = vpow.pop %v641
  %v643 = vmul.f32 %v618, 1.442695
  %v644 = vpow.pop %v643
  %v645 = vmul.f32 %v619, 1.442695
  %v646 = vpow.pop %v645
  %v647 = vmul.f32 %v620, 1.442695
  %v648 = vpow.pop %v647
  %v649 = vmul.f32 %v621, 1.442695
  %v650 = vpow.pop %v649
  %v651 = vmul.f32 %v622, 1.442695
  %v652 = vpow.pop %v651
  %v653 = vmul.f32 %v623, 1.442695
  %v654 = vpow.pop %v653
  %v655 = vmul.f32 %v624, 1.442695
  %v656 = vpow.pop %v655
  %v657 = vpack.c.bf16 %v628, %v626
  %v658 = vpack.c.bf16 %v632, %v630
  %v659 = vpack.c.bf16 %v636, %v634
  %v660 = vpack.c.bf16 %v640, %v638
  %v661 = vpack.c.bf16 %v644, %v642
  %v662 = vpack.c.bf16 %v648, %v646
  %v663 = vpack.c.bf16 %v652, %v650
  %v664 = vpack.c.bf16 %v656, %v654
  %v665 = vpack.c.bf16 %v39, %v39
  %v667 = vshrl.u32 %v665, 16
  %v669 = vshll.u32 %v665, 16
  %v671 = vrot.slane %v669, 1
  %v672 = vor.u32 %v667, %v671
  %674 = vmatpush.bf16.xpose.msra.mxu0 %v664
  %675 = vmatpush.bf16.xpose.msra.mxu0 %v663
  %676 = vmatpush.bf16.xpose.msra.mxu0 %v662
  %677 = vmatpush.bf16.xpose.msra.mxu0 %v661
  %678 = vmatpush.bf16.xpose.msra.mxu0 %v660
  %679 = vmatpush.bf16.xpose.msra.mxu0 %v659
  %680 = vmatpush.bf16.xpose.msra.mxu0 %v658
  %681 = vmatpush.bf16.xpose.msra.mxu0 %v657
  %682 = vmatmul.bf16.gmra.mxu0 %v672
  %v683 = vpop.f32.mrf.mxu0
  %v684 = vadd.f32 0.0, %v683
  %v685 = vpop.f32.mrf.mxu0
  %686 = vdwg.mxu0
  %v687 = vrcp.pop %v684
  %v689 = vrot.slane %v687, 1
  %v691 = vmul.f32 %v684, %v689
  %693 = vset.pattern.permute.xlu0 0
  %694 = vperm.xlu0 %693, %v39
  %v695 = vpop.permute.xlu0 %694
  %v696 = vrot.slane %v695, 3
  %v698 = vadd.f32 %v691, %v696
  %699 = vst [vmem:[%s3] sm:$0x1] %v698
  // Predicated region
  $region14: #{cnn_stocks_forward.1} parent=0 // pred_check
    _
  $region15: #{cnn_stocks_forward.1} parent=0 // pred_check_branch
    %701 = sbr.rel (0) target = $region17
  $region16: #{cnn_stocks_forward.1} parent=0 // pred_region
    _
  $region17: #{cnn_stocks_forward.1} parent=0 // pred_fallthru
    _
  // Predicated region
  $region18: #{cnn_stocks_forward.1} parent=0 // pred_check
    _
  $region19: #{cnn_stocks_forward.1} parent=0 // pred_check_branch
    %703 = sbr.rel (0) target = $region21
  $region20: #{cnn_stocks_forward.1} parent=0 // pred_region
    _
  $region21: #{cnn_stocks_forward.1} parent=0 // pred_fallthru
    _

</llo_original>
